<compile_context>
chip_gen: v6e
topology: v6e:2x2x1
jax: 0.10.0
libtpu: 0.0.40
codegen_flags: <defaults>
</compile_context>

<pallas_src>
import jax
import jax.numpy as jnp
from jax import lax
from jax.experimental import pallas as pl
from jax.experimental.pallas import tpu as pltpu


def _row_to_col(row):
    """(1, n) -> (n, 1) without a transpose/reshape: diagonal mask + lane reduction."""
    n = row.shape[1]
    r = lax.broadcasted_iota(jnp.int32, (n, n), 0)
    c = lax.broadcasted_iota(jnp.int32, (n, n), 1)
    diag = jnp.where(r == c, jnp.broadcast_to(row, (n, n)), 0.0)
    return jnp.sum(diag, axis=-1, keepdims=True)


def gcn_kernel(x_ref, adj_ref, slab_ref, wlast_ref, wp3_ref, out_ref, h0c_s, h2_s):
    f32 = jnp.float32
    n = adj_ref.shape[0]
    f = x_ref.shape[1]
    ck = wp3_ref.shape[0]          # output (k) chunk handled by this grid step
    t = pl.program_id(0)

    # ---- stage 1 (grid step 0 only): mlp1 -> gc1 -> gc2, results kept in VMEM scratch ----
    @pl.when(t == 0)
    def _():
        # Packed parameter slab; static sub-windows are free.
        wg2a = slab_ref[0:n, :]                    # (N, N)  gc2 weight acting on H1
        w1t = slab_ref[n:n + f, :]                 # (F, N)  mlp1 weight (transposed)
        wg1 = slab_ref[n + f:n + f + 1, :]         # (1, N)  gc1 weight
        bg1 = slab_ref[n + f + 1:n + f + 2, :]     # (1, N)
        wg2b = slab_ref[n + f + 2:n + f + 3, :]    # (1, N)  gc2 weight acting on H0^T
        bg2 = slab_ref[n + f + 3:n + f + 4, :]     # (1, N)
        adj = adj_ref[...]

        # mlp1: H0 = relu(x @ W1^T)
        h0 = jnp.maximum(jnp.dot(x_ref[...], w1t, preferred_element_type=f32), 0.0)
        h0col = _row_to_col(h0)                                   # H0^T, (N, 1)

        # gc1: relu(adj @ (H0^T @ Wg1) + bg1) == relu((adj @ H0^T) outer Wg1 + bg1)
        a1col = jnp.dot(adj, h0col, preferred_element_type=f32)   # (N, 1)
        h1 = jnp.maximum(a1col * wg1 + bg1, 0.0)                  # outer product on the VPU
        # TODO(synk): F.dropout is stochastic; eval-mode identity here.

        # gc2 on concat([H1, H0^T], -1); the concat is folded into split weights.
        b1 = jnp.dot(adj, h1, preferred_element_type=f32)         # adj @ H1
        pre2 = (jnp.dot(b1, wg2a, preferred_element_type=f32)
                + a1col * wg2b + bg2)
        h2_s[...] = jnp.maximum(pre2, 0.0)
        h0c_s[...] = h0col

    # ---- stage 2 (every grid step): pred output columns [t*ck, (t+1)*ck) ----
    # part_main[k] = sum_{i,j} H2[i, j] * Wp3[k, i, j]  (single fused VPU contraction;
    # replaces the previous per-node unrolled loop of degenerate 1-row MXU matmuls).
    prod = wp3_ref[...] * h2_s[...]                      # (ck, N, N)
    sj = jnp.sum(prod, axis=-1, keepdims=True)           # (ck, N, 1): contract j (lanes)
    sj2 = sj.reshape(ck * n, 1)                          # merge leading dims, minor kept
    m_ids = lax.broadcasted_iota(jnp.int32, (ck * n, ck), 0)
    k_ids = lax.broadcasted_iota(jnp.int32, (ck * n, ck), 1)
    grp = jnp.logical_and(m_ids >= k_ids * n, m_ids < (k_ids + 1) * n)
    part_main = jnp.sum(jnp.where(grp, jnp.broadcast_to(sj2, (ck * n, ck)), 0.0),
                        axis=0, keepdims=True)           # (1, ck): contract i, k on lanes
    # part_last[k] = sum_i H0^T[i] * Wlast[i, k]
    part_last = jnp.sum(wlast_ref[...] * h0c_s[...], axis=0, keepdims=True)   # (1, ck)
    out_ref[...] = jnp.maximum(part_main + part_last, 0.0)


def gcn_forward(x, adj, params, *, num_k_chunks=1):
    """Pallas-backed forward pass. x: (1, F), adj: (N, N).

    num_k_chunks streams the (N, N, N) pred weight through VMEM in (N/num_k_chunks)-wide
    output chunks; set it so one double-buffered chunk fits the per-generation VMEM
    budget (v5e/v6e/v7x). At the demo size a single chunk is optimal.
    """
    W1, Wg1, bg1, Wg2, bg2, Wp = (params[k] for k in
                                  ("W1", "Wg1", "bg1", "Wg2", "bg2", "Wp"))
    n = adj.shape[0]
    f = x.shape[1]
    assert n % num_k_chunks == 0
    ck = n // num_k_chunks
    # Keep output/weight chunks either whole or 128-lane aligned so every BlockSpec
    # satisfies the (8, 128) tiling rule.
    assert ck == n or ck % 128 == 0

    # ---- host-side layout plumbing only (no compute) ----
    w1t = W1.T                                        # (F, N)
    wg2a = Wg2[:n, :]                                 # (N, N)
    wg2b = Wg2[n:, :]                                 # (1, N)
    slab = jnp.concatenate(
        [wg2a, w1t, Wg1, bg1.reshape(1, n), wg2b, bg2.reshape(1, n)], axis=0)  # (N+F+4, N)
    wpt3 = Wp.T.reshape(n, n + 1, n)                  # [i, j, k] row-major flatten structure
    wp3 = jnp.transpose(wpt3[:, :n, :], (2, 0, 1))    # (N, N, N) [k, i, j]: acts on H2
    wlast = wpt3[:, n, :]                             # (N, N)   [i, k]:    acts on H0^T

    flops = 2 * f * n + 4 * n * n + 6 * n ** 3
    bytes_accessed = 4 * (x.size + adj.size + slab.size + wlast.size + wp3.size + n)

    grid_spec = pltpu.PrefetchScalarGridSpec(
        num_scalar_prefetch=0,
        grid=(num_k_chunks,),
        in_specs=[
            pl.BlockSpec((1, f), lambda t: (0, 0)),           # x
            pl.BlockSpec((n, n), lambda t: (0, 0)),           # adj
            pl.BlockSpec(slab.shape, lambda t: (0, 0)),       # packed small parameters
            pl.BlockSpec((n, ck), lambda t: (0, t)),          # Wlast, chunked over k
            pl.BlockSpec((ck, n, n), lambda t: (t, 0, 0)),    # Wp main, streamed over k
        ],
        out_specs=pl.BlockSpec((1, ck), lambda t: (0, t)),
        scratch_shapes=[pltpu.VMEM((n, 1), jnp.float32),      # H0^T
                        pltpu.VMEM((n, n), jnp.float32)],     # H2
    )
    return pl.pallas_call(
        gcn_kernel,
        out_shape=jax.ShapeDtypeStruct((1, n), jnp.float32),
        grid_spec=grid_spec,
        compiler_params=pltpu.CompilerParams(dimension_semantics=("arbitrary",)),
        cost_estimate=pl.CostEstimate(flops=flops, transcendentals=0,
                                      bytes_accessed=bytes_accessed),
    )(x, adj, slab, wlast, wp3)


def gcn_reference(x, adj, params):
    """Plain-JAX mirror of the PyTorch forward (eval mode) for verification."""
    W1, Wg1, bg1, Wg2, bg2, Wp = (params[k] for k in
                                  ("W1", "Wg1", "bg1", "Wg2", "bg2", "Wp"))
    h0 = jax.nn.relu(x @ W1.T)                              # (1, N)
    h0t = h0.T                                              # (N, 1)
    h1 = jax.nn.relu(adj @ (h0t @ Wg1) + bg1)               # (N, N)
    h1c = jnp.concatenate([h1, h0t], axis=-1)               # (N, N+1)
    h2 = jax.nn.relu(adj @ (h1c @ Wg2) + bg2)               # (N, N)
    h2c = jnp.concatenate([h2, h0t], axis=-1).reshape(1, -1)
    return jax.nn.relu(h2c @ Wp.T)                          # (1, N)


if __name__ == "__main__":
    n_features, n_nodes = 16, 8
    key = jax.random.PRNGKey(0)
    kx, kadj, k1, k2, k3, k4, k5, k6 = jax.random.split(key, 8)

    x = jax.random.normal(kx, (1, n_features), dtype=jnp.float32)
    adj = jax.random.uniform(kadj, (n_nodes, n_nodes), dtype=jnp.float32)

    params = {
        # mlp1: Linear(n_features, n_nodes, bias=False) -> weight (N, F)
        "W1": 0.1 * jax.random.normal(k1, (n_nodes, n_features), dtype=jnp.float32),
        # gc1: GCN_impl(1, n_nodes): weight (1, N), bias (N,)
        "Wg1": 0.1 * jax.random.normal(k2, (1, n_nodes), dtype=jnp.float32),
        "bg1": 0.1 * jax.random.normal(k3, (n_nodes,), dtype=jnp.float32),
        # gc2: GCN_impl(N+1, N): weight (N+1, N), bias (N,)
        "Wg2": 0.1 * jax.random.normal(k4, (n_nodes + 1, n_nodes), dtype=jnp.float32),
        "bg2": 0.1 * jax.random.normal(k5, (n_nodes,), dtype=jnp.float32),
        # pred: Linear((N+1)*N, N, bias=False) -> weight (N, (N+1)*N)
        "Wp": 0.1 * jax.random.normal(k6, (n_nodes, (n_nodes + 1) * n_nodes),
                                      dtype=jnp.float32),
    }

    out = jax.block_until_ready(gcn_forward(x, adj, params))
    ref = jax.block_until_ready(gcn_reference(x, adj, params))

    assert out.shape == (1, n_nodes)
    assert jnp.allclose(out, ref, atol=1e-5, rtol=1e-5), (out, ref)
    print("KERNEL_OK")
</pallas_src>

<mosaic_0001>
module attributes {stable_mosaic.version = 11 : i64} {
  func.func @gcn_kernel(%arg0: i32, %arg1: memref<1x16xf32, #tpu.memory_space<vmem>>, %arg2: memref<8x8xf32, #tpu.memory_space<vmem>>, %arg3: memref<28x8xf32, #tpu.memory_space<vmem>>, %arg4: memref<8x8xf32, #tpu.memory_space<vmem>>, %arg5: memref<8x8x8xf32, #tpu.memory_space<vmem>>, %arg6: memref<1x8xf32, #tpu.memory_space<vmem>>, %arg7: memref<8x1xf32, #tpu.memory_space<vmem>>, %arg8: memref<8x8xf32, #tpu.memory_space<vmem>>) attributes {dimension_semantics = [#tpu.dimension_semantics<arbitrary>], iteration_bounds = array<i64: 1>, scalar_prefetch = 0 : i64, scratch_operands = 2 : i64, tpu.core_type = #tpu.core_type<tc>, window_params = [{pipeline_mode = #tpu.pipeline_mode<synchronous>, transform_indices = @transform_0, window_bounds = array<i64: 1, 16>}, {pipeline_mode = #tpu.pipeline_mode<synchronous>, transform_indices = @transform_1, window_bounds = array<i64: 8, 8>}, {pipeline_mode = #tpu.pipeline_mode<synchronous>, transform_indices = @transform_2, window_bounds = array<i64: 28, 8>}, {transform_indices = @transform_3, window_bounds = array<i64: 8, 8>}, {transform_indices = @transform_4, window_bounds = array<i64: 8, 8, 8>}, {transform_indices = @transform_5, window_bounds = array<i64: 1, 8>}]} {
    %c0_i32 = arith.constant 0 : i32
    %0 = arith.cmpi eq, %arg0, %c0_i32 : i32
    %1 = arith.extui %0 : i1 to i32
    %c0_i32_0 = arith.constant 0 : i32
    %2 = arith.cmpi ne, %1, %c0_i32_0 : i32
    scf.if %2 {
      %c0_16 = arith.constant 0 : index
      %c0_17 = arith.constant 0 : index
      %38 = vector.load %arg3[%c0_16, %c0_17] : memref<28x8xf32, #tpu.memory_space<vmem>>, vector<8x8xf32>
      %c8 = arith.constant 8 : index
      %c0_18 = arith.constant 0 : index
      %39 = vector.load %arg3[%c8, %c0_18] : memref<28x8xf32, #tpu.memory_space<vmem>>, vector<16x8xf32>
      %c24 = arith.constant 24 : index
      %c0_19 = arith.constant 0 : index
      %40 = vector.load %arg3[%c24, %c0_19] : memref<28x8xf32, #tpu.memory_space<vmem>>, vector<1x8xf32>
      %c25 = arith.constant 25 : index
      %c0_20 = arith.constant 0 : index
      %41 = vector.load %arg3[%c25, %c0_20] : memref<28x8xf32, #tpu.memory_space<vmem>>, vector<1x8xf32>
      %c26 = arith.constant 26 : index
      %c0_21 = arith.constant 0 : index
      %42 = vector.load %arg3[%c26, %c0_21] : memref<28x8xf32, #tpu.memory_space<vmem>>, vector<1x8xf32>
      %c27 = arith.constant 27 : index
      %c0_22 = arith.constant 0 : index
      %43 = vector.load %arg3[%c27, %c0_22] : memref<28x8xf32, #tpu.memory_space<vmem>>, vector<1x8xf32>
      %c0_23 = arith.constant 0 : index
      %c0_24 = arith.constant 0 : index
      %44 = vector.load %arg2[%c0_23, %c0_24] : memref<8x8xf32, #tpu.memory_space<vmem>>, vector<8x8xf32>
      %c0_25 = arith.constant 0 : index
      %c0_26 = arith.constant 0 : index
      %45 = vector.load %arg1[%c0_25, %c0_26] : memref<1x16xf32, #tpu.memory_space<vmem>>, vector<1x16xf32>
      %cst_27 = arith.constant dense<0.000000e+00> : vector<1x8xf32>
      %46 = tpu.matmul %45, %39, %cst_27 {dimension_numbers = #tpu.dot_dimension_numbers<[1], [0], [0], [1], [0, 0, 1, 1], [], []>} : vector<1x16xf32>, vector<16x8xf32>, vector<1x8xf32> -> vector<1x8xf32>
      %cst_28 = arith.constant 0.000000e+00 : f32
      %47 = vector.broadcast %cst_28 : f32 to vector<1x8xf32>
      %48 = arith.maximumf %46, %47 : vector<1x8xf32>
      %49 = tpu.iota {dimensions = array<i32: 0>} : vector<8x8xi32>
      %50 = tpu.iota {dimensions = array<i32: 1>} : vector<8x8xi32>
      %51 = arith.cmpi eq, %49, %50 : vector<8x8xi32>
      %52 = vector.shape_cast %48 : vector<1x8xf32> to vector<1x8xf32>
      %53 = vector.broadcast %52 : vector<1x8xf32> to vector<8x8xf32>
      %cst_29 = arith.constant 0.000000e+00 : f32
      %54 = vector.broadcast %cst_29 : f32 to vector<8x8xf32>
      %55 = arith.select %51, %53, %54 : vector<8x8xi1>, vector<8x8xf32>
      %cst_30 = arith.constant dense<0.000000e+00> : vector<8xf32>
      %56 = vector.multi_reduction <add>, %55, %cst_30 [1] : vector<8x8xf32> to vector<8xf32>
      %57 = vector.shape_cast %56 : vector<8xf32> to vector<8x1xf32>
      %cst_31 = arith.constant dense<0.000000e+00> : vector<8x1xf32>
      %58 = tpu.matmul %44, %57, %cst_31 {dimension_numbers = #tpu.dot_dimension_numbers<[1], [0], [0], [1], [0, 0, 1, 1], [], []>} : vector<8x8xf32>, vector<8x1xf32>, vector<8x1xf32> -> vector<8x1xf32>
      %59 = vector.broadcast %58 : vector<8x1xf32> to vector<8x8xf32>
      %60 = vector.broadcast %40 : vector<1x8xf32> to vector<8x8xf32>
      %61 = arith.mulf %59, %60 : vector<8x8xf32>
      %62 = vector.broadcast %41 : vector<1x8xf32> to vector<8x8xf32>
      %63 = arith.addf %61, %62 : vector<8x8xf32>
      %cst_32 = arith.constant 0.000000e+00 : f32
      %64 = vector.broadcast %cst_32 : f32 to vector<8x8xf32>
      %65 = arith.maximumf %63, %64 : vector<8x8xf32>
      %cst_33 = arith.constant dense<0.000000e+00> : vector<8x8xf32>
      %66 = tpu.matmul %44, %65, %cst_33 {dimension_numbers = #tpu.dot_dimension_numbers<[1], [0], [0], [1], [0, 0, 1, 1], [], []>} : vector<8x8xf32>, vector<8x8xf32>, vector<8x8xf32> -> vector<8x8xf32>
      %cst_34 = arith.constant dense<0.000000e+00> : vector<8x8xf32>
      %67 = tpu.matmul %66, %38, %cst_34 {dimension_numbers = #tpu.dot_dimension_numbers<[1], [0], [0], [1], [0, 0, 1, 1], [], []>} : vector<8x8xf32>, vector<8x8xf32>, vector<8x8xf32> -> vector<8x8xf32>
      %68 = vector.broadcast %58 : vector<8x1xf32> to vector<8x8xf32>
      %69 = vector.broadcast %42 : vector<1x8xf32> to vector<8x8xf32>
      %70 = arith.mulf %68, %69 : vector<8x8xf32>
      %71 = arith.addf %67, %70 : vector<8x8xf32>
      %72 = vector.broadcast %43 : vector<1x8xf32> to vector<8x8xf32>
      %73 = arith.addf %71, %72 : vector<8x8xf32>
      %cst_35 = arith.constant 0.000000e+00 : f32
      %74 = vector.broadcast %cst_35 : f32 to vector<8x8xf32>
      %75 = arith.maximumf %73, %74 : vector<8x8xf32>
      %c0_36 = arith.constant 0 : index
      %c0_37 = arith.constant 0 : index
      %76 = vector.load %arg8[%c0_36, %c0_37] : memref<8x8xf32, #tpu.memory_space<vmem>>, vector<8x8xf32>
      tpu.vector_store %arg8[%c0_36, %c0_37], %75 {strides = array<i32>} : memref<8x8xf32, #tpu.memory_space<vmem>>, vector<8x8xf32>,
      %c0_38 = arith.constant 0 : index
      %c0_39 = arith.constant 0 : index
      %77 = vector.load %arg7[%c0_38, %c0_39] : memref<8x1xf32, #tpu.memory_space<vmem>>, vector<8x1xf32>
      tpu.vector_store %arg7[%c0_38, %c0_39], %57 {strides = array<i32>} : memref<8x1xf32, #tpu.memory_space<vmem>>, vector<8x1xf32>,
    } else {
    }
    %c0 = arith.constant 0 : index
    %c0_1 = arith.constant 0 : index
    %c0_2 = arith.constant 0 : index
    %3 = vector.load %arg5[%c0, %c0_1, %c0_2] : memref<8x8x8xf32, #tpu.memory_space<vmem>>, vector<8x8x8xf32>
    %c0_3 = arith.constant 0 : index
    %c0_4 = arith.constant 0 : index
    %4 = vector.load %arg8[%c0_3, %c0_4] : memref<8x8xf32, #tpu.memory_space<vmem>>, vector<8x8xf32>
    %5 = vector.shape_cast %4 : vector<8x8xf32> to vector<1x8x8xf32>
    %6 = vector.broadcast %5 : vector<1x8x8xf32> to vector<8x8x8xf32>
    %7 = arith.mulf %3, %6 : vector<8x8x8xf32>
    %cst = arith.constant dense<0.000000e+00> : vector<8x8xf32>
    %8 = vector.multi_reduction <add>, %7, %cst [2] : vector<8x8x8xf32> to vector<8x8xf32>
    %9 = vector.shape_cast %8 : vector<8x8xf32> to vector<8x8x1xf32>
    %10 = vector.shape_cast %9 : vector<8x8x1xf32> to vector<64x1xf32>
    %11 = tpu.iota {dimensions = array<i32: 0>} : vector<64x8xi32>
    %12 = tpu.iota {dimensions = array<i32: 1>} : vector<64x8xi32>
    %c8_i32 = arith.constant 8 : i32
    %13 = vector.broadcast %c8_i32 : i32 to vector<64x8xi32>
    %14 = arith.muli %12, %13 : vector<64x8xi32>
    %15 = arith.cmpi sge, %11, %14 : vector<64x8xi32>
    %c1_i32 = arith.constant 1 : i32
    %16 = vector.broadcast %c1_i32 : i32 to vector<64x8xi32>
    %17 = arith.addi %12, %16 : vector<64x8xi32>
    %c8_i32_5 = arith.constant 8 : i32
    %18 = vector.broadcast %c8_i32_5 : i32 to vector<64x8xi32>
    %19 = arith.muli %17, %18 : vector<64x8xi32>
    %20 = arith.cmpi slt, %11, %19 : vector<64x8xi32>
    %21 = arith.andi %15, %20 : vector<64x8xi1>
    %22 = vector.shape_cast %10 : vector<64x1xf32> to vector<64x1xf32>
    %23 = vector.broadcast %22 : vector<64x1xf32> to vector<64x8xf32>
    %cst_6 = arith.constant 0.000000e+00 : f32
    %24 = vector.broadcast %cst_6 : f32 to vector<64x8xf32>
    %25 = arith.select %21, %23, %24 : vector<64x8xi1>, vector<64x8xf32>
    %cst_7 = arith.constant dense<0.000000e+00> : vector<8xf32>
    %26 = vector.multi_reduction <add>, %25, %cst_7 [0] : vector<64x8xf32> to vector<8xf32>
    %27 = vector.shape_cast %26 : vector<8xf32> to vector<1x8xf32>
    %c0_8 = arith.constant 0 : index
    %c0_9 = arith.constant 0 : index
    %28 = vector.load %arg4[%c0_8, %c0_9] : memref<8x8xf32, #tpu.memory_space<vmem>>, vector<8x8xf32>
    %c0_10 = arith.constant 0 : index
    %c0_11 = arith.constant 0 : index
    %29 = vector.load %arg7[%c0_10, %c0_11] : memref<8x1xf32, #tpu.memory_space<vmem>>, vector<8x1xf32>
    %30 = vector.broadcast %29 : vector<8x1xf32> to vector<8x8xf32>
    %31 = arith.mulf %28, %30 : vector<8x8xf32>
    %cst_12 = arith.constant dense<0.000000e+00> : vector<8xf32>
    %32 = vector.multi_reduction <add>, %31, %cst_12 [0] : vector<8x8xf32> to vector<8xf32>
    %33 = vector.shape_cast %32 : vector<8xf32> to vector<1x8xf32>
    %34 = arith.addf %27, %33 : vector<1x8xf32>
    %cst_13 = arith.constant 0.000000e+00 : f32
    %35 = vector.broadcast %cst_13 : f32 to vector<1x8xf32>
    %36 = arith.maximumf %34, %35 : vector<1x8xf32>
    %c0_14 = arith.constant 0 : index
    %c0_15 = arith.constant 0 : index
    %37 = vector.load %arg6[%c0_14, %c0_15] : memref<1x8xf32, #tpu.memory_space<vmem>>, vector<1x8xf32>
    tpu.vector_store %arg6[%c0_14, %c0_15], %36 {strides = array<i32>} : memref<1x8xf32, #tpu.memory_space<vmem>>, vector<1x8xf32>,
    return
  }
  func.func @transform_0(%arg0: i32) -> (i32, i32) {
    %c0_i32 = arith.constant 0 : i32
    %c0_i32_0 = arith.constant 0 : i32
    %c0_i32_1 = arith.constant 0 : i32
    return %c0_i32, %c0_i32_0 : i32, i32
  }
  func.func @transform_1(%arg0: i32) -> (i32, i32) {
    %c0_i32 = arith.constant 0 : i32
    %c0_i32_0 = arith.constant 0 : i32
    %c0_i32_1 = arith.constant 0 : i32
    return %c0_i32, %c0_i32_0 : i32, i32
  }
  func.func @transform_2(%arg0: i32) -> (i32, i32) {
    %c0_i32 = arith.constant 0 : i32
    %c0_i32_0 = arith.constant 0 : i32
    %c0_i32_1 = arith.constant 0 : i32
    return %c0_i32, %c0_i32_0 : i32, i32
  }
  func.func @transform_3(%arg0: i32) -> (i32, i32) {
    %c0_i32 = arith.constant 0 : i32
    %c0_i32_0 = arith.constant 0 : i32
    return %c0_i32, %arg0 : i32, i32
  }
  func.func @transform_4(%arg0: i32) -> (i32, i32, i32) {
    %c0_i32 = arith.constant 0 : i32
    %c0_i32_0 = arith.constant 0 : i32
    %c0_i32_1 = arith.constant 0 : i32
    return %arg0, %c0_i32, %c0_i32_0 : i32, i32, i32
  }
  func.func @transform_5(%arg0: i32) -> (i32, i32) {
    %c0_i32 = arith.constant 0 : i32
    %c0_i32_0 = arith.constant 0 : i32
    return %c0_i32, %arg0 : i32, i32
  }
}

</mosaic_0001>

<llo_original>
// kernel: tpu_custom_call.1
$region0: #{tpu_custom_call.1}
  #allocation0 [shape = 'u32[]', space=smem, size = 0x4, offset = 0x4, fixed_abs, tag = 'smem constant byte address 0x4 - core index']
  #allocation1 [shape = 'u32[144,128]{1,0:T(1,128)}', space=vmem, size = 0x12000, scoped, tag = 'internal scratch']
  #allocation2 [shape = 'f32[8,1]{1,0:T(8,128)}', space=vmem, size = 0x1000, scoped, tag = 'scratch operand']
  #allocation3 [shape = 'f32[8,8]{1,0:T(8,128)}', space=vmem, size = 0x1000, scoped, tag = 'scratch operand']
  %s0 = inlined_call_operand.vmem [shape: f32[1,16], index: 0, kind: input, shape index: {}]
  %s1 = inlined_call_operand.vmem [shape: f32[8,8], index: 1, kind: input, shape index: {}]
  %s2 = inlined_call_operand.vmem [shape: f32[28,8], index: 2, kind: input, shape index: {}]
  %s3 = inlined_call_operand.vmem [shape: f32[8,8], index: 3, kind: input, shape index: {}]
  %s4 = inlined_call_operand.hbm [shape: f32[8,8,8], index: 4, kind: input, shape index: {}]
  %s5 = inlined_call_operand.hbm [shape: f32[1,8], index: 5, kind: output, shape index: {}]
  %s6 = sld [smem:[#allocation0]]
  $region38: #{tpu_custom_call.1} parent=0
    _
  %s8 = ssub.s32 1, %s6
  %s9 = scalar_select 0, %s8, %s6
  $region1: #{tpu_custom_call.1} parent=0
    #allocation4 [shape = 'u8[32768]{0}', space=vmem, size = 0x8000, scoped, tag = 'input window, operand 4, single buffered']
    #allocation5 [shape = 's32[1]{0}', space=sflag, size = 0x4, scoped, tag = 'scoped memory for tpu_custom_call.1']
    #allocation6 [shape = 's32[1]{0}', space=sflag, size = 0x4, scoped, tag = 'scoped memory for tpu_custom_call.1']
    #allocation7 [shape = 'u8[512]{0}', space=vmem, size = 0x400, scoped, tag = 'output window, operand 0, single buffered']
    %10 = vsyncpa [#allocation5], 0
    %11 = vsyncpa [#allocation6], 0
    // Predicated region
    $region2: #{tpu_custom_call.1} parent=1 // pred_check
      _
    $region3: #{tpu_custom_call.1} parent=1 // pred_check_branch
      %13 = sbr.rel (0) target = $region5
    $region4: #{tpu_custom_call.1} parent=1 // pred_region
      _
    $region5: #{tpu_custom_call.1} parent=1 // pred_fallthru
      _
    // Predicated region
    $region6: #{tpu_custom_call.1} parent=1 // pred_check
      _
    $region7: #{tpu_custom_call.1} parent=1 // pred_check_branch
      %15 = sbr.rel (0) target = $region9
    $region8: #{tpu_custom_call.1} parent=1 // pred_region
      _
    $region9: #{tpu_custom_call.1} parent=1 // pred_fallthru
      _
    // Predicated region
    $region10: #{tpu_custom_call.1} parent=1 // pred_check
      _
    $region11: #{tpu_custom_call.1} parent=1 // pred_check_branch
      %17 = sbr.rel (0) target = $region13
    $region12: #{tpu_custom_call.1} parent=1 // pred_region
      _
    $region13: #{tpu_custom_call.1} parent=1 // pred_fallthru
      _
    // Predicated region
    $region14: #{tpu_custom_call.1} parent=1 // pred_check
      _
    $region15: #{tpu_custom_call.1} parent=1 // pred_check_branch
      %19 = sbr.rel (0) target = $region17
    $region16: #{tpu_custom_call.1} parent=1 // pred_region
      _
    $region17: #{tpu_custom_call.1} parent=1 // pred_fallthru
      _
    // Predicated region
    $region18: #{tpu_custom_call.1} parent=1 // pred_check
      _
    $region19: #{tpu_custom_call.1} parent=1 // pred_check_branch
      %21 = sbr.rel (0) target = $region21
    $region20: #{tpu_custom_call.1} parent=1 // pred_region
      %s23 = ssub.s32 1024, 1024
      %24 = vsyncadd [#allocation5], %s23
      %s25 = sshll.u32 [#allocation4], 4
      %s26 = int_to_ptr.vmem [resolvable:$true] %s25
      %31 = dma.hbm_to_vmem [thread:$0]  %s4, 1024, %s26, [#allocation5], 128, 128, 8
    $region21: #{tpu_custom_call.1} parent=1 // pred_fallthru
      _
    // Predicated region
    $region22: #{tpu_custom_call.1} parent=1 // pred_check
      _
    $region23: #{tpu_custom_call.1} parent=1 // pred_check_branch
      %33 = sbr.rel (0) target = $region25
    $region24: #{tpu_custom_call.1} parent=1 // pred_region
      %34 = dma.done [#allocation5], 1024
    $region25: #{tpu_custom_call.1} parent=1 // pred_fallthru
      _
    %p35 = scmp.eq.s32.totalorder 0, 0
    // Predicated region
    $region26: #{tpu_custom_call.1} parent=1 // pred_check
      %p36 = pneg %p35
    $region27: #{tpu_custom_call.1} parent=1 // pred_check_branch
      %38 = sbr.rel (%p36) target = $region29
    $region28: #{tpu_custom_call.1} parent=1 // pred_region
      %v39 = vld [vmem:[%s2] sm:$0xff]
      %v40 = vld [vmem:[%s2 + $0x8] sm:$0xff]
      %v41 = vld [vmem:[%s2 + $0x10] sm:$0xff]
      %v42 = vld [vmem:[%s2 + $0x18] sm:$0x1]
      %v43 = vld [vmem:[%s2 + $0x19] sm:$0x1]
      %v44 = vld [vmem:[%s2 + $0x1a] sm:$0x1]
      %v45 = vld [vmem:[%s2 + $0x1b] sm:$0x1]
      %v46 = vld [vmem:[%s1] sm:$0xff]
      %v47 = vld [vmem:[%s0] sm:$0x1]
      %vm48 = vcmask 130048
      %v50 = vsel %vm48, %v47, 0
      %52 = vmatprep.subr.mxu0 0.0
      %53 = vmatpush1.msra.mxu0 0.0
      %54 = vmatprep.subr.mxu0 0.0
      %55 = vmatpush1.msra.mxu0 0.0
      %56 = vmatprep.subr.mxu0 0.0
      %57 = vmatpush1.msra.mxu0 0.0
      %58 = vmatprep.subr.mxu0 0.0
      %59 = vmatpush1.msra.mxu0 0.0
      %60 = vmatprep.subr.mxu0 0.0
      %61 = vmatpush1.msra.mxu0 0.0
      %62 = vmatprep.subr.mxu0 0.0
      %63 = vmatpush1.msra.mxu0 0.0
      %64 = vmatprep.subr.mxu0 0.0
      %65 = vmatpush1.msra.mxu0 0.0
      %66 = vmatprep.subr.mxu0 0.0
      %67 = vmatpush1.msra.mxu0 0.0
      %68 = vmatprep.subr.mxu0 0.0
      %69 = vmatpush1.msra.mxu0 0.0
      %70 = vmatprep.subr.mxu0 0.0
      %71 = vmatpush1.msra.mxu0 0.0
      %72 = vmatprep.subr.mxu0 0.0
      %73 = vmatpush1.msra.mxu0 0.0
      %74 = vmatprep.subr.mxu0 0.0
      %75 = vmatpush1.msra.mxu0 0.0
      %76 = vmatprep.subr.mxu0 0.0
      %77 = vmatpush1.msra.mxu0 0.0
      %78 = vmatprep.subr.mxu0 0.0
      %79 = vmatpush1.msra.mxu0 0.0
      %80 = vmatprep.subr.mxu0 0.0
      %81 = vmatpush1.msra.mxu0 %v41
      %82 = vmatprep.subr.mxu0 0.0
      %83 = vmatpush1.msra.mxu0 %v40
      %84 = vmatprep.subr.mxu0 0.0
      %85 = vmatpush2.msra.mxu0 0.0
      %86 = vmatprep.subr.mxu0 0.0
      %87 = vmatpush2.msra.mxu0 0.0
      %88 = vmatprep.subr.mxu0 0.0
      %89 = vmatpush2.msra.mxu0 0.0
      %90 = vmatprep.subr.mxu0 0.0
      %91 = vmatpush2.msra.mxu0 0.0
      %92 = vmatprep.subr.mxu0 0.0
      %93 = vmatpush2.msra.mxu0 0.0
      %94 = vmatprep.subr.mxu0 0.0
      %95 = vmatpush2.msra.mxu0 0.0
      %96 = vmatprep.subr.mxu0 0.0
      %97 = vmatpush2.msra.mxu0 0.0
      %98 = vmatprep.subr.mxu0 0.0
      %99 = vmatpush2.msra.mxu0 0.0
      %100 = vmatprep.subr.mxu0 0.0
      %101 = vmatpush2.msra.mxu0 0.0
      %102 = vmatprep.subr.mxu0 0.0
      %103 = vmatpush2.msra.mxu0 0.0
      %104 = vmatprep.subr.mxu0 0.0
      %105 = vmatpush2.msra.mxu0 0.0
      %106 = vmatprep.subr.mxu0 0.0
      %107 = vmatpush2.msra.mxu0 0.0
      %108 = vmatprep.subr.mxu0 0.0
      %109 = vmatpush2.msra.mxu0 0.0
      %110 = vmatprep.subr.mxu0 0.0
      %111 = vmatpush2.msra.mxu0 0.0
      %112 = vmatprep.subr.mxu0 0.0
      %113 = vmatpush2.msra.mxu0 0.0
      %114 = vmatprep.subr.mxu0 0.0
      %115 = vmatpush2.msra.mxu0 0.0
      %116 = vmatprep.mubr.f32.mxu0 0.0
      %117 = vmatmul.mubr.f32.gmra.mxu0 %v50
      %v118 = vpop.f32.mrf.mxu0
      %v119 = vadd.f32 0.0, %v118
      %v120 = vpop.f32.mrf.mxu0
      %121 = vdwg.mxu0
      %v122 = vmax.f32 %v119, 0.0
      %v123 = vlaneseq
      %v124 = vshrl.u32 %v123, 7
      %v125 = vlaneseq
      %v126 = vand.u32 %v125, 127
      %vm127 = vcmp.eq.s32.totalorder %v124, %v126
      %v128 = vlaneseq
      %v129 = vshrl.u32 %v128, 7
      %v130 = vsub.s32 0, %v129
      %v131 = vrot.slane %v122, %v130
      %v132 = vsel %vm127, %v131, 0.0
      %vm133 = vcmask 64512
      %v134 = vsel %vm133, %v132, 0.0
      %135 = vadd.xlane.f32.xlu0 %v134
      %v136 = vpop.xlane.xlu0 %135
      %v138 = vsel %vm133, %v46, 0
      %140 = vmatprep.subr.mxu0 0.0
      %141 = vmatpush1.msra.mxu0 0.0
      %142 = vmatprep.subr.mxu0 0.0
      %143 = vmatpush1.msra.mxu0 0.0
      %144 = vmatprep.subr.mxu0 0.0
      %145 = vmatpush1.msra.mxu0 0.0
      %146 = vmatprep.subr.mxu0 0.0
      %147 = vmatpush1.msra.mxu0 0.0
      %148 = vmatprep.subr.mxu0 0.0
      %149 = vmatpush1.msra.mxu0 0.0
      %150 = vmatprep.subr.mxu0 0.0
      %151 = vmatpush1.msra.mxu0 0.0
      %152 = vmatprep.subr.mxu0 0.0
      %153 = vmatpush1.msra.mxu0 0.0
      %154 = vmatprep.subr.mxu0 0.0
      %155 = vmatpush1.msra.mxu0 0.0
      %156 = vmatprep.subr.mxu0 0.0
      %157 = vmatpush1.msra.mxu0 0.0
      %158 = vmatprep.subr.mxu0 0.0
      %159 = vmatpush1.msra.mxu0 0.0
      %160 = vmatprep.subr.mxu0 0.0
      %161 = vmatpush1.msra.mxu0 0.0
      %162 = vmatprep.subr.mxu0 0.0
      %163 = vmatpush1.msra.mxu0 0.0
      %164 = vmatprep.subr.mxu0 0.0
      %165 = vmatpush1.msra.mxu0 0.0
      %166 = vmatprep.subr.mxu0 0.0
      %167 = vmatpush1.msra.mxu0 0.0
      %168 = vmatprep.subr.mxu0 0.0
      %169 = vmatpush1.msra.mxu0 0.0
      %170 = vmatprep.subr.mxu0 0.0
      %171 = vmatpush1.msra.mxu0 %v136
      %172 = vmatprep.subr.mxu0 0.0
      %173 = vmatpush2.msra.mxu0 0.0
      %174 = vmatprep.subr.mxu0 0.0
      %175 = vmatpush2.msra.mxu0 0.0
      %176 = vmatprep.subr.mxu0 0.0
      %177 = vmatpush2.msra.mxu0 0.0
      %178 = vmatprep.subr.mxu0 0.0
      %179 = vmatpush2.msra.mxu0 0.0
      %180 = vmatprep.subr.mxu0 0.0
      %181 = vmatpush2.msra.mxu0 0.0
      %182 = vmatprep.subr.mxu0 0.0
      %183 = vmatpush2.msra.mxu0 0.0
      %184 = vmatprep.subr.mxu0 0.0
      %185 = vmatpush2.msra.mxu0 0.0
      %186 = vmatprep.subr.mxu0 0.0
      %187 = vmatpush2.msra.mxu0 0.0
      %188 = vmatprep.subr.mxu0 0.0
      %189 = vmatpush2.msra.mxu0 0.0
      %190 = vmatprep.subr.mxu0 0.0
      %191 = vmatpush2.msra.mxu0 0.0
      %192 = vmatprep.subr.mxu0 0.0
      %193 = vmatpush2.msra.mxu0 0.0
      %194 = vmatprep.subr.mxu0 0.0
      %195 = vmatpush2.msra.mxu0 0.0
      %196 = vmatprep.subr.mxu0 0.0
      %197 = vmatpush2.msra.mxu0 0.0
      %198 = vmatprep.subr.mxu0 0.0
      %199 = vmatpush2.msra.mxu0 0.0
      %200 = vmatprep.subr.mxu0 0.0
      %201 = vmatpush2.msra.mxu0 0.0
      %202 = vmatprep.subr.mxu0 0.0
      %203 = vmatpush2.msra.mxu0 0.0
      %204 = vmatprep.mubr.f32.mxu0 0.0
      %205 = vmatmul.mubr.f32.gmra.mxu0 %v138
      %v206 = vpop.f32.mrf.mxu0
      %v207 = vadd.f32 0.0, %v206
      %v208 = vpop.f32.mrf.mxu0
      %209 = vdwg.mxu0
      %211 = vset.pattern.permute.xlu0 0
      %212 = vperm.xlu0 %211, %v207
      %v213 = vpop.permute.xlu0 %212
      %v215 = vlaneseq
      %v216 = vshrl.u32 %v215, 7
      %v217 = vsub.s32 0, %v216
      %v218 = vrot.slane %v42, %v217
      %v219 = vmul.f32 %v213, %v218
      %v220 = vlaneseq
      %v221 = vshrl.u32 %v220, 7
      %v222 = vsub.s32 0, %v221
      %v223 = vrot.slane %v43, %v222
      %v224 = vadd.f32 %v219, %v223
      %v225 = vmax.f32 %v224, 0.0
      %226 = vmatprep.subr.mxu0 0.0
      %227 = vmatpush1.msra.mxu0 0.0
      %228 = vmatprep.subr.mxu0 0.0
      %229 = vmatpush1.msra.mxu0 0.0
      %230 = vmatprep.subr.mxu0 0.0
      %231 = vmatpush1.msra.mxu0 0.0
      %232 = vmatprep.subr.mxu0 0.0
      %233 = vmatpush1.msra.mxu0 0.0
      %234 = vmatprep.subr.mxu0 0.0
      %235 = vmatpush1.msra.mxu0 0.0
      %236 = vmatprep.subr.mxu0 0.0
      %237 = vmatpush1.msra.mxu0 0.0
      %238 = vmatprep.subr.mxu0 0.0
      %239 = vmatpush1.msra.mxu0 0.0
      %240 = vmatprep.subr.mxu0 0.0
      %241 = vmatpush1.msra.mxu0 0.0
      %242 = vmatprep.subr.mxu0 0.0
      %243 = vmatpush1.msra.mxu0 0.0
      %244 = vmatprep.subr.mxu0 0.0
      %245 = vmatpush1.msra.mxu0 0.0
      %246 = vmatprep.subr.mxu0 0.0
      %247 = vmatpush1.msra.mxu0 0.0
      %248 = vmatprep.subr.mxu0 0.0
      %249 = vmatpush1.msra.mxu0 0.0
      %250 = vmatprep.subr.mxu0 0.0
      %251 = vmatpush1.msra.mxu0 0.0
      %252 = vmatprep.subr.mxu0 0.0
      %253 = vmatpush1.msra.mxu0 0.0
      %254 = vmatprep.subr.mxu0 0.0
      %255 = vmatpush1.msra.mxu0 0.0
      %256 = vmatprep.subr.mxu0 0.0
      %257 = vmatpush1.msra.mxu0 %v225
      %258 = vmatprep.subr.mxu0 0.0
      %259 = vmatpush2.msra.mxu0 0.0
      %260 = vmatprep.subr.mxu0 0.0
      %261 = vmatpush2.msra.mxu0 0.0
      %262 = vmatprep.subr.mxu0 0.0
      %263 = vmatpush2.msra.mxu0 0.0
      %264 = vmatprep.subr.mxu0 0.0
      %265 = vmatpush2.msra.mxu0 0.0
      %266 = vmatprep.subr.mxu0 0.0
      %267 = vmatpush2.msra.mxu0 0.0
      %268 = vmatprep.subr.mxu0 0.0
      %269 = vmatpush2.msra.mxu0 0.0
      %270 = vmatprep.subr.mxu0 0.0
      %271 = vmatpush2.msra.mxu0 0.0
      %272 = vmatprep.subr.mxu0 0.0
      %273 = vmatpush2.msra.mxu0 0.0
      %274 = vmatprep.subr.mxu0 0.0
      %275 = vmatpush2.msra.mxu0 0.0
      %276 = vmatprep.subr.mxu0 0.0
      %277 = vmatpush2.msra.mxu0 0.0
      %278 = vmatprep.subr.mxu0 0.0
      %279 = vmatpush2.msra.mxu0 0.0
      %280 = vmatprep.subr.mxu0 0.0
      %281 = vmatpush2.msra.mxu0 0.0
      %282 = vmatprep.subr.mxu0 0.0
      %283 = vmatpush2.msra.mxu0 0.0
      %284 = vmatprep.subr.mxu0 0.0
      %285 = vmatpush2.msra.mxu0 0.0
      %286 = vmatprep.subr.mxu0 0.0
      %287 = vmatpush2.msra.mxu0 0.0
      %288 = vmatprep.subr.mxu0 0.0
      %289 = vmatpush2.msra.mxu0 0.0
      %290 = vmatprep.mubr.f32.mxu0 0.0
      %291 = vmatmul.mubr.f32.gmra.mxu0 %v138
      %v292 = vpop.f32.mrf.mxu0
      %v293 = vadd.f32 0.0, %v292
      %v294 = vpop.f32.mrf.mxu0
      %295 = vdwg.mxu0
      %v296 = vlaneseq
      %v297 = vshrl.u32 %v296, 7
      %v298 = vsub.s32 0, %v297
      %v299 = vrot.slane %v44, %v298
      %v300 = vmul.f32 %v213, %v299
      %v302 = vsel %vm133, %v293, 0
      %304 = vmatprep.subr.mxu0 0.0
      %305 = vmatpush1.msra.mxu0 0.0
      %306 = vmatprep.subr.mxu0 0.0
      %307 = vmatpush1.msra.mxu0 0.0
      %308 = vmatprep.subr.mxu0 0.0
      %309 = vmatpush1.msra.mxu0 0.0
      %310 = vmatprep.subr.mxu0 0.0
      %311 = vmatpush1.msra.mxu0 0.0
      %312 = vmatprep.subr.mxu0 0.0
      %313 = vmatpush1.msra.mxu0 0.0
      %314 = vmatprep.subr.mxu0 0.0
      %315 = vmatpush1.msra.mxu0 0.0
      %316 = vmatprep.subr.mxu0 0.0
      %317 = vmatpush1.msra.mxu0 0.0
      %318 = vmatprep.subr.mxu0 0.0
      %319 = vmatpush1.msra.mxu0 0.0
      %320 = vmatprep.subr.mxu0 0.0
      %321 = vmatpush1.msra.mxu0 0.0
      %322 = vmatprep.subr.mxu0 0.0
      %323 = vmatpush1.msra.mxu0 0.0
      %324 = vmatprep.subr.mxu0 0.0
      %325 = vmatpush1.msra.mxu0 0.0
      %326 = vmatprep.subr.mxu0 0.0
      %327 = vmatpush1.msra.mxu0 0.0
      %328 = vmatprep.subr.mxu0 0.0
      %329 = vmatpush1.msra.mxu0 0.0
      %330 = vmatprep.subr.mxu0 0.0
      %331 = vmatpush1.msra.mxu0 0.0
      %332 = vmatprep.subr.mxu0 0.0
      %333 = vmatpush1.msra.mxu0 0.0
      %334 = vmatprep.subr.mxu0 0.0
      %335 = vmatpush1.msra.mxu0 %v39
      %336 = vmatprep.subr.mxu0 0.0
      %337 = vmatpush2.msra.mxu0 0.0
      %338 = vmatprep.subr.mxu0 0.0
      %339 = vmatpush2.msra.mxu0 0.0
      %340 = vmatprep.subr.mxu0 0.0
      %341 = vmatpush2.msra.mxu0 0.0
      %342 = vmatprep.subr.mxu0 0.0
      %343 = vmatpush2.msra.mxu0 0.0
      %344 = vmatprep.subr.mxu0 0.0
      %345 = vmatpush2.msra.mxu0 0.0
      %346 = vmatprep.subr.mxu0 0.0
      %347 = vmatpush2.msra.mxu0 0.0
      %348 = vmatprep.subr.mxu0 0.0
      %349 = vmatpush2.msra.mxu0 0.0
      %350 = vmatprep.subr.mxu0 0.0
      %351 = vmatpush2.msra.mxu0 0.0
      %352 = vmatprep.subr.mxu0 0.0
      %353 = vmatpush2.msra.mxu0 0.0
      %354 = vmatprep.subr.mxu0 0.0
      %355 = vmatpush2.msra.mxu0 0.0
      %356 = vmatprep.subr.mxu0 0.0
      %357 = vmatpush2.msra.mxu0 0.0
      %358 = vmatprep.subr.mxu0 0.0
      %359 = vmatpush2.msra.mxu0 0.0
      %360 = vmatprep.subr.mxu0 0.0
      %361 = vmatpush2.msra.mxu0 0.0
      %362 = vmatprep.subr.mxu0 0.0
      %363 = vmatpush2.msra.mxu0 0.0
      %364 = vmatprep.subr.mxu0 0.0
      %365 = vmatpush2.msra.mxu0 0.0
      %366 = vmatprep.subr.mxu0 0.0
      %367 = vmatpush2.msra.mxu0 0.0
      %368 = vmatprep.mubr.f32.mxu0 0.0
      %369 = vmatmul.mubr.f32.gmra.mxu0 %v302
      %v370 = vpop.f32.mrf.mxu0
      %v371 = vadd.f32 %v300, %v370
      %v372 = vpop.f32.mrf.mxu0
      %373 = vdwg.mxu0
      %v374 = vlaneseq
      %v375 = vshrl.u32 %v374, 7
      %v376 = vsub.s32 0, %v375
      %v377 = vrot.slane %v45, %v376
      %v378 = vadd.f32 %v371, %v377
      %v379 = vmax.f32 %v378, 0.0
      %380 = vst.msk [vmem:[#allocation3] sm:$0xff] %vm133, %v379
      %vm381 = vcmask 7168
      %382 = vst.msk [vmem:[#allocation2] sm:$0xff] %vm381, %v136
    $region29: #{tpu_custom_call.1} parent=1 // pred_fallthru
      _
    %v383 = vld [vmem:[#allocation4] sm:$0xff]
    %v384 = vld [vmem:[#allocation4 + $0x8] sm:$0xff]
    %v385 = vld [vmem:[#allocation4 + $0x10] sm:$0xff]
    %v386 = vld [vmem:[#allocation4 + $0x18] sm:$0xff]
    %v387 = vld [vmem:[#allocation4 + $0x20] sm:$0xff]
    %v388 = vld [vmem:[#allocation4 + $0x28] sm:$0xff]
    %v389 = vld [vmem:[#allocation4 + $0x30] sm:$0xff]
    %v390 = vld [vmem:[#allocation4 + $0x38] sm:$0xff]
    %v391 = vld [vmem:[#allocation3] sm:$0xff]
    %v392 = vmul.f32 %v383, %v391
    %v393 = vmul.f32 %v384, %v391
    %v394 = vmul.f32 %v385, %v391
    %v395 = vmul.f32 %v386, %v391
    %v396 = vmul.f32 %v387, %v391
    %v397 = vmul.f32 %v388, %v391
    %v398 = vmul.f32 %v389, %v391
    %v399 = vmul.f32 %v390, %v391
    %vm400 = vcmask 64512
    %v401 = vsel %vm400, %v392, 0.0
    %402 = vadd.xlane.f32.xlu0 %v401
    %v403 = vpop.xlane.xlu0 %402
    %v404 = vsel %vm400, %v393, 0.0
    %405 = vadd.xlane.f32.xlu0 %v404
    %v406 = vpop.xlane.xlu0 %405
    %v407 = vsel %vm400, %v394, 0.0
    %408 = vadd.xlane.f32.xlu0 %v407
    %v409 = vpop.xlane.xlu0 %408
    %v410 = vsel %vm400, %v395, 0.0
    %411 = vadd.xlane.f32.xlu0 %v410
    %v412 = vpop.xlane.xlu0 %411
    %v413 = vsel %vm400, %v396, 0.0
    %414 = vadd.xlane.f32.xlu0 %v413
    %v415 = vpop.xlane.xlu0 %414
    %v416 = vsel %vm400, %v397, 0.0
    %417 = vadd.xlane.f32.xlu0 %v416
    %v418 = vpop.xlane.xlu0 %417
    %v419 = vsel %vm400, %v398, 0.0
    %420 = vadd.xlane.f32.xlu0 %v419
    %v421 = vpop.xlane.xlu0 %420
    %v422 = vsel %vm400, %v399, 0.0
    %423 = vadd.xlane.f32.xlu0 %v422
    %v424 = vpop.xlane.xlu0 %423
    %v425 = vlaneseq
    %v426 = vshrl.u32 %v425, 7
    %v427 = vadd.s32 %v426, 8
    %v428 = vadd.s32 %v426, 16
    %v429 = vadd.s32 %v426, 24
    %v430 = vadd.s32 %v426, 32
    %v431 = vadd.s32 %v426, 40
    %v432 = vadd.s32 %v426, 48
    %v433 = vadd.s32 %v426, 56
    %v434 = vlaneseq
    %v435 = vand.u32 %v434, 127
    %v436 = vmul.u32 %v435, 8
    %vm437 = vcmp.ge.s32.totalorder %v426, %v436
    %vm438 = vcmp.ge.s32.totalorder %v427, %v436
    %vm439 = vcmp.ge.s32.totalorder %v428, %v436
    %vm440 = vcmp.ge.s32.totalorder %v429, %v436
    %vm441 = vcmp.ge.s32.totalorder %v430, %v436
    %vm442 = vcmp.ge.s32.totalorder %v431, %v436
    %vm443 = vcmp.ge.s32.totalorder %v432, %v436
    %vm444 = vcmp.ge.s32.totalorder %v433, %v436
    %v445 = vadd.s32 %v435, 1
    %v446 = vmul.u32 %v445, 8
    %vm447 = vcmp.lt.s32.totalorder %v426, %v446
    %vm448 = vcmp.lt.s32.totalorder %v427, %v446
    %vm449 = vcmp.lt.s32.totalorder %v428, %v446
    %vm450 = vcmp.lt.s32.totalorder %v429, %v446
    %vm451 = vcmp.lt.s32.totalorder %v430, %v446
    %vm452 = vcmp.lt.s32.totalorder %v431, %v446
    %vm453 = vcmp.lt.s32.totalorder %v432, %v446
    %vm454 = vcmp.lt.s32.totalorder %v433, %v446
    %vm455 = vmand %vm437, %vm447
    %vm456 = vmand %vm438, %vm448
    %vm457 = vmand %vm439, %vm449
    %vm458 = vmand %vm440, %vm450
    %vm459 = vmand %vm441, %vm451
    %vm460 = vmand %vm442, %vm452
    %vm461 = vmand %vm443, %vm453
    %vm462 = vmand %vm444, %vm454
    %v463 = vsel %vm455, %v403, 0.0
    %v464 = vsel %vm456, %v406, 0.0
    %v465 = vsel %vm457, %v409, 0.0
    %v466 = vsel %vm458, %v412, 0.0
    %v467 = vsel %vm459, %v415, 0.0
    %v468 = vsel %vm460, %v418, 0.0
    %v469 = vsel %vm461, %v421, 0.0
    %v470 = vsel %vm462, %v424, 0.0
    %v471 = vsel %vm400, %v463, 0.0
    %v472 = vsel %vm400, %v464, 0.0
    %v473 = vadd.f32 %v471, %v472
    %v474 = vsel %vm400, %v465, 0.0
    %v475 = vadd.f32 %v473, %v474
    %v476 = vsel %vm400, %v466, 0.0
    %v477 = vadd.f32 %v475, %v476
    %v478 = vsel %vm400, %v467, 0.0
    %v479 = vadd.f32 %v477, %v478
    %v480 = vsel %vm400, %v468, 0.0
    %v481 = vadd.f32 %v479, %v480
    %v482 = vsel %vm400, %v469, 0.0
    %v483 = vadd.f32 %v481, %v482
    %v484 = vsel %vm400, %v470, 0.0
    %v485 = vadd.f32 %v483, %v484
    %v486 = vrot.slane %v485, 4
    %v487 = vadd.f32 %v485, %v486
    %v488 = vrot.slane %v487, 2
    %v489 = vadd.f32 %v487, %v488
    %v490 = vrot.slane %v489, 1
    %v491 = vadd.f32 %v489, %v490
    %v492 = vld [vmem:[%s3] sm:$0xff]
    %v493 = vld [vmem:[#allocation2] sm:$0xff]
    %495 = vset.pattern.permute.xlu0 0
    %496 = vperm.xlu0 %495, %v493
    %v497 = vpop.permute.xlu0 %496
    %v499 = vmul.f32 %v492, %v497
    %v500 = vsel %vm400, %v499, 0.0
    %v501 = vrot.slane %v500, 4
    %v502 = vadd.f32 %v500, %v501
    %v503 = vrot.slane %v502, 2
    %v504 = vadd.f32 %v502, %v503
    %v505 = vrot.slane %v504, 1
    %v506 = vadd.f32 %v504, %v505
    %v507 = vadd.f32 %v491, %v506
    %v508 = vmax.f32 %v507, 0.0
    %vm509 = vcmask 57344
    %510 = vst.msk [vmem:[#allocation7] sm:$0x1] %vm509, %v508
    // Predicated region
    $region30: #{tpu_custom_call.1} parent=1 // pred_check
      _
    $region31: #{tpu_custom_call.1} parent=1 // pred_check_branch
      %512 = sbr.rel (0) target = $region33
    $region32: #{tpu_custom_call.1} parent=1 // pred_region
      %s514 = ssub.s32 16, 16
      %515 = vsyncadd [#allocation6], %s514
      %s517 = sshll.u32 [#allocation7], 4
      %s518 = int_to_ptr.vmem [resolvable:$true] %s517
      %520 = dma.vmem_to_hbm [thread:$0]  %s518, 16, %s5, [#allocation6]
    $region33: #{tpu_custom_call.1} parent=1 // pred_fallthru
      _
    // Predicated region
    $region34: #{tpu_custom_call.1} parent=1 // pred_check
      _
    $region35: #{tpu_custom_call.1} parent=1 // pred_check_branch
      %522 = sbr.rel (0) target = $region37
    $region36: #{tpu_custom_call.1} parent=1 // pred_region
      %523 = dma.done [#allocation6], 16
    $region37: #{tpu_custom_call.1} parent=1 // pred_fallthru
      _
    %524 = vsyncpa [#allocation5], 1
    %525 = vsyncpa [#allocation6], 1

</llo_original>
